<compile_context>
chip_gen: v6e
topology: v6e:2x2x1
jax: 0.10.0
libtpu: 0.0.40
codegen_flags: <defaults>
</compile_context>

<pallas_src>
import functools

import jax
import jax.numpy as jnp
from jax.experimental import pallas as pl
from jax.experimental.pallas import tpu as pltpu


def _round_up(n, m):
    return ((n + m - 1) // m) * m


def decoder_kernel(x_ref, w1_ref, b1_ref, w2_ref, b2_ref, o_ref):
    """One batch tile: Linear -> ReLU -> Linear -> Sigmoid."""
    # MXU: bf16 operands, f32 accumulation (cast is a no-op if x is already bf16).
    x = x_ref[...].astype(jnp.bfloat16)
    h = jnp.dot(x, w1_ref[...], preferred_element_type=jnp.float32)
    h = jnp.maximum(h + b1_ref[...], 0.0)                       # bias + ReLU in f32 (VPU)
    y = jnp.dot(h.astype(jnp.bfloat16), w2_ref[...],
                preferred_element_type=jnp.float32)
    y = y + b2_ref[...]
    # EUP-friendly sigmoid: exp + approximate reciprocal stay off the VALU slots.
    o_ref[...] = pl.reciprocal(1.0 + jnp.exp(-y), approx=True).astype(o_ref.dtype)


@functools.partial(jax.jit, static_argnames=("output_size", "block_b", "out_dtype"))
def decoder_forward(x, w1, b1, w2, b2, *, output_size, block_b=1024,
                    out_dtype=jnp.float32):
    """x: (B, latent); w1: (latent, H) bf16; b1: (1, H) f32;
       w2: (H, out_p) bf16 (lane-padded); b2: (1, out_p) f32 -> (B, output_size)."""
    B, latent = x.shape
    hidden = w1.shape[1]
    out_p = w2.shape[1]

    # Weights should be pre-padded at init; pad here as a (jit-fused) fallback.
    if out_p % 128 != 0:
        out_pp = _round_up(out_p, 128)
        w2 = jnp.pad(w2, ((0, 0), (0, out_pp - out_p)))
        b2 = jnp.pad(b2, ((0, 0), (0, out_pp - out_p)))
        out_p = out_pp

    # Batch tile: multiple of 16 (bf16 sublane packing), capped at block_b.
    tb = min(block_b, _round_up(B, 16))
    b_pad = _round_up(B, tb)
    if b_pad != B:
        x = jnp.pad(x, ((0, b_pad - B), (0, 0)))        # fuses under jit
    num_steps = b_pad // tb

    # Deeper input pipelining only pays off with a multi-step grid.
    x_pipeline = pl.Buffered(3) if num_steps >= 3 else None
    x_bufs = 3 if num_steps >= 3 else 2

    # Scoped-VMEM budget: pipelined x tiles + double-buffered out tiles + resident
    # weights/biases, with 2x margin; floor 16 MiB, cap 64 MiB (v7x physical).
    out_isz = jnp.dtype(out_dtype).itemsize
    vmem_need = (x_bufs * tb * latent * x.dtype.itemsize
                 + 2 * tb * out_p * out_isz
                 + latent * hidden * w1.dtype.itemsize
                 + hidden * out_p * w2.dtype.itemsize
                 + hidden * b1.dtype.itemsize
                 + out_p * b2.dtype.itemsize)
    vmem_limit = int(min(max(2 * vmem_need, 16 * 1024 * 1024), 64 * 1024 * 1024))

    y = pl.pallas_call(
        decoder_kernel,
        out_shape=jax.ShapeDtypeStruct((b_pad, out_p), out_dtype),
        grid=(num_steps,),
        in_specs=[
            pl.BlockSpec((tb, latent), lambda i: (i, 0),
                         pipeline_mode=x_pipeline),             # x: tiled over batch
            pl.BlockSpec((latent, hidden), lambda i: (0, 0)),   # weights: VMEM-resident
            pl.BlockSpec((1, hidden), lambda i: (0, 0)),
            pl.BlockSpec((hidden, out_p), lambda i: (0, 0)),
            pl.BlockSpec((1, out_p), lambda i: (0, 0)),
        ],
        out_specs=pl.BlockSpec((tb, out_p), lambda i: (i, 0)),  # lane-dense output
        compiler_params=pltpu.CompilerParams(
            # Batch tiles are independent: shard them across TensorCores where the
            # hardware has more than one.
            # TODO(synk): evaluate pltpu.CORE_PARALLEL on v7x once verified by trace.
            dimension_semantics=("parallel",),
            vmem_limit_bytes=vmem_limit,
        ),
    )(x, w1, b1, w2, b2)
    # Pad-row / pad-column removal fuses with the consumer under jit.
    return y[:B, :output_size]


def init_params(key, latent_size, hidden_size, output_size):
    """PyTorch-Linear-style init, transposed to (in, out). Weights stored in bf16
    (MXU operands); biases in f32. w2/b2 are lane-padded ONCE here (static weights),
    keeping the pallas_call as the only op in the per-call hot path."""
    k1, k2, k3, k4 = jax.random.split(key, 4)
    lim1 = 1.0 / jnp.sqrt(latent_size)
    lim2 = 1.0 / jnp.sqrt(hidden_size)
    w1 = jax.random.uniform(k1, (latent_size, hidden_size), jnp.float32, -lim1, lim1)
    b1 = jax.random.uniform(k2, (1, hidden_size), jnp.float32, -lim1, lim1)
    w2 = jax.random.uniform(k3, (hidden_size, output_size), jnp.float32, -lim2, lim2)
    b2 = jax.random.uniform(k4, (1, output_size), jnp.float32, -lim2, lim2)
    out_p = _round_up(output_size, 128)
    if out_p != output_size:
        w2 = jnp.pad(w2, ((0, 0), (0, out_p - output_size)))
        b2 = jnp.pad(b2, ((0, 0), (0, out_p - output_size)))
    return w1.astype(jnp.bfloat16), b1, w2.astype(jnp.bfloat16), b2


def decoder_reference(x, w1, b1, w2, b2, output_size):
    # Pure-JAX reference with the same bf16-operand / f32-accumulate numerics.
    h = jnp.dot(x.astype(jnp.bfloat16), w1, preferred_element_type=jnp.float32) + b1
    h = jnp.maximum(h, 0.0)
    y = jnp.dot(h.astype(jnp.bfloat16), w2, preferred_element_type=jnp.float32) + b2
    return jax.nn.sigmoid(y)[:, :output_size]


if __name__ == "__main__":
    latent_size = 64
    hidden_size = 128
    output_size = 200   # deliberately not a multiple of 128 -> exercises lane padding

    key = jax.random.PRNGKey(0)
    kx, kp = jax.random.split(key)
    w1, b1, w2, b2 = init_params(kp, latent_size, hidden_size, output_size)

    # 1) Small batch, f32 output (single grid step).
    x = jax.random.normal(kx, (8, latent_size), dtype=jnp.float32)
    out = jax.block_until_ready(
        decoder_forward(x, w1, b1, w2, b2, output_size=output_size))
    ref = decoder_reference(x, w1, b1, w2, b2, output_size)
    assert out.shape == (8, output_size)
    assert jnp.allclose(out, ref, atol=1e-2, rtol=1e-2)

    # 2) Ragged batch, default (large) batch tile, f32 output.
    xb = jax.random.normal(kx, (300, latent_size), dtype=jnp.float32)
    outb = jax.block_until_ready(
        decoder_forward(xb, w1, b1, w2, b2, output_size=output_size))
    refb = decoder_reference(xb, w1, b1, w2, b2, output_size)
    assert outb.shape == (300, output_size)
    assert jnp.allclose(outb, refb, atol=1e-2, rtol=1e-2)

    # 3) Multi-step grid (block_b=64 -> 5 steps) with 3-deep input pipelining and a
    #    caller-requested bf16 output (halves HBM write traffic).
    outc = jax.block_until_ready(
        decoder_forward(xb, w1, b1, w2, b2, output_size=output_size,
                        block_b=64, out_dtype=jnp.bfloat16))
    assert outc.shape == (300, output_size)
    assert jnp.allclose(outc.astype(jnp.float32), refb, atol=2e-2, rtol=2e-2)

    print("KERNEL_OK")
</pallas_src>

<mosaic_0001>
module attributes {stable_mosaic.version = 11 : i64} {
  func.func @decoder_kernel(%arg0: i32, %arg1: memref<16x64xf32, #tpu.memory_space<vmem>>, %arg2: memref<64x128xbf16, #tpu.memory_space<vmem>>, %arg3: memref<1x128xf32, #tpu.memory_space<vmem>>, %arg4: memref<128x256xbf16, #tpu.memory_space<vmem>>, %arg5: memref<1x256xf32, #tpu.memory_space<vmem>>, %arg6: memref<16x256xf32, #tpu.memory_space<vmem>>) attributes {dimension_semantics = [#tpu.dimension_semantics<parallel>], iteration_bounds = array<i64: 1>, scalar_prefetch = 0 : i64, scratch_operands = 0 : i64, tpu.core_type = #tpu.core_type<tc>, window_params = [{transform_indices = @transform_0, window_bounds = array<i64: 16, 64>}, {pipeline_mode = #tpu.pipeline_mode<synchronous>, transform_indices = @transform_1, window_bounds = array<i64: 64, 128>}, {pipeline_mode = #tpu.pipeline_mode<synchronous>, transform_indices = @transform_2, window_bounds = array<i64: 1, 128>}, {pipeline_mode = #tpu.pipeline_mode<synchronous>, transform_indices = @transform_3, window_bounds = array<i64: 128, 256>}, {pipeline_mode = #tpu.pipeline_mode<synchronous>, transform_indices = @transform_4, window_bounds = array<i64: 1, 256>}, {transform_indices = @transform_5, window_bounds = array<i64: 16, 256>}]} {
    %c0 = arith.constant 0 : index
    %c0_0 = arith.constant 0 : index
    %0 = vector.load %arg1[%c0, %c0_0] : memref<16x64xf32, #tpu.memory_space<vmem>>, vector<16x64xf32>
    %1 = arith.truncf %0 : vector<16x64xf32> to vector<16x64xbf16>
    %c0_1 = arith.constant 0 : index
    %c0_2 = arith.constant 0 : index
    %2 = vector.load %arg2[%c0_1, %c0_2] : memref<64x128xbf16, #tpu.memory_space<vmem>>, vector<64x128xbf16>
    %cst = arith.constant dense<0.000000e+00> : vector<16x128xf32>
    %3 = tpu.matmul %1, %2, %cst {dimension_numbers = #tpu.dot_dimension_numbers<[1], [0], [0], [1], [0, 0, 1, 1], [], []>} : vector<16x64xbf16>, vector<64x128xbf16>, vector<16x128xf32> -> vector<16x128xf32>
    %c0_3 = arith.constant 0 : index
    %c0_4 = arith.constant 0 : index
    %4 = vector.load %arg3[%c0_3, %c0_4] : memref<1x128xf32, #tpu.memory_space<vmem>>, vector<1x128xf32>
    %5 = vector.broadcast %4 : vector<1x128xf32> to vector<16x128xf32>
    %6 = arith.addf %3, %5 : vector<16x128xf32>
    %cst_5 = arith.constant 0.000000e+00 : f32
    %7 = vector.broadcast %cst_5 : f32 to vector<16x128xf32>
    %8 = arith.maximumf %6, %7 : vector<16x128xf32>
    %9 = arith.truncf %8 : vector<16x128xf32> to vector<16x128xbf16>
    %c0_6 = arith.constant 0 : index
    %c0_7 = arith.constant 0 : index
    %10 = vector.load %arg4[%c0_6, %c0_7] : memref<128x256xbf16, #tpu.memory_space<vmem>>, vector<128x256xbf16>
    %cst_8 = arith.constant dense<0.000000e+00> : vector<16x256xf32>
    %11 = tpu.matmul %9, %10, %cst_8 {dimension_numbers = #tpu.dot_dimension_numbers<[1], [0], [0], [1], [0, 0, 1, 1], [], []>} : vector<16x128xbf16>, vector<128x256xbf16>, vector<16x256xf32> -> vector<16x256xf32>
    %c0_9 = arith.constant 0 : index
    %c0_10 = arith.constant 0 : index
    %12 = vector.load %arg5[%c0_9, %c0_10] : memref<1x256xf32, #tpu.memory_space<vmem>>, vector<1x256xf32>
    %13 = vector.broadcast %12 : vector<1x256xf32> to vector<16x256xf32>
    %14 = arith.addf %11, %13 : vector<16x256xf32>
    %cst_11 = arith.constant 0.000000e+00 : f32
    %15 = vector.broadcast %cst_11 : f32 to vector<16x256xf32>
    %16 = arith.subf %15, %14 : vector<16x256xf32>
    %17 = math.exp %16 : vector<16x256xf32>
    %cst_12 = arith.constant 1.000000e+00 : f32
    %18 = vector.broadcast %cst_12 : f32 to vector<16x256xf32>
    %19 = arith.addf %18, %17 : vector<16x256xf32>
    %20 = tpu.reciprocal %19 {approx = true} : vector<16x256xf32> -> vector<16x256xf32>
    %c0_13 = arith.constant 0 : index
    %c0_14 = arith.constant 0 : index
    %21 = vector.load %arg6[%c0_13, %c0_14] : memref<16x256xf32, #tpu.memory_space<vmem>>, vector<16x256xf32>
    tpu.vector_store %arg6[%c0_13, %c0_14], %20 {strides = array<i32>} : memref<16x256xf32, #tpu.memory_space<vmem>>, vector<16x256xf32>,
    return
  }
  func.func @transform_0(%arg0: i32) -> (i32, i32) {
    %c0_i32 = arith.constant 0 : i32
    %c0_i32_0 = arith.constant 0 : i32
    return %arg0, %c0_i32 : i32, i32
  }
  func.func @transform_1(%arg0: i32) -> (i32, i32) {
    %c0_i32 = arith.constant 0 : i32
    %c0_i32_0 = arith.constant 0 : i32
    %c0_i32_1 = arith.constant 0 : i32
    return %c0_i32, %c0_i32_0 : i32, i32
  }
  func.func @transform_2(%arg0: i32) -> (i32, i32) {
    %c0_i32 = arith.constant 0 : i32
    %c0_i32_0 = arith.constant 0 : i32
    %c0_i32_1 = arith.constant 0 : i32
    return %c0_i32, %c0_i32_0 : i32, i32
  }
  func.func @transform_3(%arg0: i32) -> (i32, i32) {
    %c0_i32 = arith.constant 0 : i32
    %c0_i32_0 = arith.constant 0 : i32
    %c0_i32_1 = arith.constant 0 : i32
    return %c0_i32, %c0_i32_0 : i32, i32
  }
  func.func @transform_4(%arg0: i32) -> (i32, i32) {
    %c0_i32 = arith.constant 0 : i32
    %c0_i32_0 = arith.constant 0 : i32
    %c0_i32_1 = arith.constant 0 : i32
    return %c0_i32, %c0_i32_0 : i32, i32
  }
  func.func @transform_5(%arg0: i32) -> (i32, i32) {
    %c0_i32 = arith.constant 0 : i32
    %c0_i32_0 = arith.constant 0 : i32
    return %arg0, %c0_i32 : i32, i32
  }
}

</mosaic_0001>

<llo_original>
// kernel: decoder_forward.1
$region0: #{decoder_forward.1}
  #allocation0 [shape = 'u32[]', space=smem, size = 0x4, offset = 0x4, fixed_abs, tag = 'smem constant byte address 0x4 - core index']
  #allocation1 [shape = 'u32[144,128]{1,0:T(1,128)}', space=vmem, size = 0x12000, scoped, tag = 'internal scratch']
  %s0 = inlined_call_operand.vmem [shape: f32[16,64], index: 0, kind: input, shape index: {}]
  %s1 = inlined_call_operand.hbm [shape: bf16[64,128], index: 1, kind: input, shape index: {}]
  %s2 = inlined_call_operand.vmem [shape: f32[1,128], index: 2, kind: input, shape index: {}]
  %s3 = inlined_call_operand.hbm [shape: bf16[128,256], index: 3, kind: input, shape index: {}]
  %s4 = inlined_call_operand.vmem [shape: f32[1,256], index: 4, kind: input, shape index: {}]
  %s5 = inlined_call_operand.vmem [shape: f32[16,256], index: 5, kind: output, shape index: {}]
  %s6 = sld [smem:[#allocation0]]
  $region38: #{decoder_forward.1} parent=0
    _
  %s8 = ssub.s32 1, %s6
  %s9 = scalar_select 0, %s8, %s6
  $region1: #{decoder_forward.1} parent=0
    #allocation2 [shape = 'u8[16384]{0}', space=vmem, size = 0x4000, scoped, tag = 'input window, operand 1, single buffered']
    #allocation3 [shape = 's32[1]{0}', space=sflag, size = 0x4, scoped, tag = 'scoped memory for decoder_forward.1']
    #allocation4 [shape = 'u8[65536]{0}', space=vmem, size = 0x10000, scoped, tag = 'input window, operand 3, single buffered']
    #allocation5 [shape = 's32[1]{0}', space=sflag, size = 0x4, scoped, tag = 'scoped memory for decoder_forward.1']
    %10 = vsyncpa [#allocation3], 0
    %11 = vsyncpa [#allocation5], 0
    // Predicated region
    $region2: #{decoder_forward.1} parent=1 // pred_check
      _
    $region3: #{decoder_forward.1} parent=1 // pred_check_branch
      %13 = sbr.rel (0) target = $region5
    $region4: #{decoder_forward.1} parent=1 // pred_region
      _
    $region5: #{decoder_forward.1} parent=1 // pred_fallthru
      _
    // Predicated region
    $region6: #{decoder_forward.1} parent=1 // pred_check
      _
    $region7: #{decoder_forward.1} parent=1 // pred_check_branch
      %15 = sbr.rel (0) target = $region9
    $region8: #{decoder_forward.1} parent=1 // pred_region
      %s17 = ssub.s32 512, 512
      %18 = vsyncadd [#allocation3], %s17
      %s19 = sshll.u32 [#allocation2], 4
      %s20 = int_to_ptr.vmem [resolvable:$true] %s19
      %25 = dma.hbm_to_vmem [thread:$0]  %s1, 512, %s20, [#allocation3], 64, 64, 4
    $region9: #{decoder_forward.1} parent=1 // pred_fallthru
      _
    // Predicated region
    $region10: #{decoder_forward.1} parent=1 // pred_check
      _
    $region11: #{decoder_forward.1} parent=1 // pred_check_branch
      %27 = sbr.rel (0) target = $region13
    $region12: #{decoder_forward.1} parent=1 // pred_region
      _
    $region13: #{decoder_forward.1} parent=1 // pred_fallthru
      _
    // Predicated region
    $region14: #{decoder_forward.1} parent=1 // pred_check
      _
    $region15: #{decoder_forward.1} parent=1 // pred_check_branch
      %29 = sbr.rel (0) target = $region17
    $region16: #{decoder_forward.1} parent=1 // pred_region
      %s31 = ssub.s32 2048, 2048
      %32 = vsyncadd [#allocation5], %s31
      %s33 = sshll.u32 [#allocation4], 4
      %s34 = int_to_ptr.vmem [resolvable:$true] %s33
      %39 = dma.hbm_to_vmem [thread:$0]  %s3, 2048, %s34, [#allocation5], 128, 128, 8
    $region17: #{decoder_forward.1} parent=1 // pred_fallthru
      _
    // Predicated region
    $region18: #{decoder_forward.1} parent=1 // pred_check
      _
    $region19: #{decoder_forward.1} parent=1 // pred_check_branch
      %41 = sbr.rel (0) target = $region21
    $region20: #{decoder_forward.1} parent=1 // pred_region
      _
    $region21: #{decoder_forward.1} parent=1 // pred_fallthru
      _
    // Predicated region
    $region22: #{decoder_forward.1} parent=1 // pred_check
      _
    $region23: #{decoder_forward.1} parent=1 // pred_check_branch
      %43 = sbr.rel (0) target = $region25
    $region24: #{decoder_forward.1} parent=1 // pred_region
      %44 = dma.done [#allocation3], 512
    $region25: #{decoder_forward.1} parent=1 // pred_fallthru
      _
    // Predicated region
    $region26: #{decoder_forward.1} parent=1 // pred_check
      _
    $region27: #{decoder_forward.1} parent=1 // pred_check_branch
      %46 = sbr.rel (0) target = $region29
    $region28: #{decoder_forward.1} parent=1 // pred_region
      %47 = dma.done [#allocation5], 2048
    $region29: #{decoder_forward.1} parent=1 // pred_fallthru
      _
    %v49 = vld [vmem:[%s0] sm:$0xff]
    %v50 = vld [vmem:[%s0 + $0x8] sm:$0xff]
    %v51 = vpack.c.bf16 %v50, %v49
    %v52 = vld [vmem:[#allocation2] sm:$0xf]
    %v53 = vld [vmem:[#allocation2 + $0x4] sm:$0xf]
    %v54 = vld [vmem:[#allocation2 + $0x8] sm:$0xf]
    %v55 = vld [vmem:[#allocation2 + $0xc] sm:$0xf]
    %v56 = vld [vmem:[#allocation2 + $0x10] sm:$0xf]
    %v57 = vld [vmem:[#allocation2 + $0x14] sm:$0xf]
    %v58 = vld [vmem:[#allocation2 + $0x18] sm:$0xf]
    %v59 = vld [vmem:[#allocation2 + $0x1c] sm:$0xf]
    %v60 = vld [vmem:[%s2] sm:$0x1]
    %v62 = vlaneseq
    %v63 = vshrl.u32 %v62, 7
    %v64 = vsub.s32 0, %v63
    %v65 = vrot.slane %v60, %v64
    %v75 = vunpack.c.l.b16 %v52
    %v76 = vunpack.c.l.b16 %v53
    %v77 = vunpack.c.l.b16 %v54
    %v78 = vunpack.c.l.b16 %v55
    %v79 = vunpack.c.l.b16 %v56
    %v80 = vunpack.c.l.b16 %v57
    %v81 = vunpack.c.l.b16 %v58
    %v82 = vunpack.c.l.b16 %v59
    %v83 = vpack.c.b16 %v76, %v75
    %v84 = vpack.c.b16 %v78, %v77
    %v85 = vpack.c.b16 %v80, %v79
    %v86 = vpack.c.b16 %v82, %v81
    %vm91 = vcmask 523264
    %v93 = vsel %vm91, %v51, 0
    %95 = vmatprep.subr.bf16.mxu0 0
    %96 = vmatpush1.bf16.msra.mxu0 0
    %97 = vmatprep.subr.bf16.mxu0 0
    %98 = vmatpush1.bf16.msra.mxu0 0
    %99 = vmatprep.subr.bf16.mxu0 0
    %100 = vmatpush1.bf16.msra.mxu0 0
    %101 = vmatprep.subr.bf16.mxu0 0
    %102 = vmatpush1.bf16.msra.mxu0 0
    %103 = vmatprep.subr.bf16.mxu0 0
    %104 = vmatpush1.bf16.msra.mxu0 %v86
    %105 = vmatprep.subr.bf16.mxu0 0
    %106 = vmatpush1.bf16.msra.mxu0 %v85
    %107 = vmatprep.subr.bf16.mxu0 0
    %108 = vmatpush1.bf16.msra.mxu0 %v84
    %109 = vmatprep.subr.bf16.mxu0 0
    %110 = vmatpush1.bf16.msra.mxu0 %v83
    %111 = vmatprep.subr.bf16.mxu0 0
    %112 = vmatpush2.bf16.msra.mxu0 0
    %113 = vmatprep.subr.bf16.mxu0 0
    %114 = vmatpush2.bf16.msra.mxu0 0
    %115 = vmatprep.subr.bf16.mxu0 0
    %116 = vmatpush2.bf16.msra.mxu0 0
    %117 = vmatprep.subr.bf16.mxu0 0
    %118 = vmatpush2.bf16.msra.mxu0 0
    %119 = vmatprep.subr.bf16.mxu0 0
    %120 = vmatpush2.bf16.msra.mxu0 0
    %121 = vmatprep.subr.bf16.mxu0 0
    %122 = vmatpush2.bf16.msra.mxu0 0
    %123 = vmatprep.subr.bf16.mxu0 0
    %124 = vmatpush2.bf16.msra.mxu0 0
    %125 = vmatprep.subr.bf16.mxu0 0
    %126 = vmatpush2.bf16.msra.mxu0 0
    %127 = vmatprep.mubr.bf16.mxu0 0
    %128 = vmatmul.mubr.bf16.gmra.mxu0 %v93
    %v129 = vpop.f32.mrf.mxu0
    %v130 = vadd.f32 %v65, %v129
    %v131 = vpop.f32.mrf.mxu0
    %v132 = vpop.f32.mrf.mxu0
    %v133 = vadd.f32 %v65, %v132
    %v134 = vpop.f32.mrf.mxu0
    %135 = vdwg.mxu0
    %v136 = vmax.f32 %v130, 0.0
    %v137 = vmax.f32 %v133, 0.0
    %v138 = vpack.c.bf16 %v137, %v136
    %v139 = vld [vmem:[#allocation4] sm:$0xff]
    %v140 = vld [vmem:[#allocation4 + $0x8] sm:$0xff]
    %v141 = vld [vmem:[#allocation4 + $0x10] sm:$0xff]
    %v142 = vld [vmem:[#allocation4 + $0x18] sm:$0xff]
    %v143 = vld [vmem:[#allocation4 + $0x20] sm:$0xff]
    %v144 = vld [vmem:[#allocation4 + $0x28] sm:$0xff]
    %v145 = vld [vmem:[#allocation4 + $0x30] sm:$0xff]
    %v146 = vld [vmem:[#allocation4 + $0x38] sm:$0xff]
    %v147 = vld [vmem:[#allocation4 + $0x40] sm:$0xff]
    %v148 = vld [vmem:[#allocation4 + $0x48] sm:$0xff]
    %v149 = vld [vmem:[#allocation4 + $0x50] sm:$0xff]
    %v150 = vld [vmem:[#allocation4 + $0x58] sm:$0xff]
    %v151 = vld [vmem:[#allocation4 + $0x60] sm:$0xff]
    %v152 = vld [vmem:[#allocation4 + $0x68] sm:$0xff]
    %v153 = vld [vmem:[#allocation4 + $0x70] sm:$0xff]
    %v154 = vld [vmem:[#allocation4 + $0x78] sm:$0xff]
    %v155 = vld [vmem:[%s4] sm:$0x3]
    %v157 = vlaneseq
    %v158 = vshrl.u32 %v157, 7
    %v159 = vsub.s32 0, %v158
    %v160 = vrot.slane %v155, %v159
    %v161 = vlaneseq
    %v162 = vshrl.u32 %v161, 7
    %v163 = vsub.s32 1, %v162
    %v164 = vrot.slane %v155, %v163
    %v183 = vunpack.c.l.b16 %v139
    %v184 = vunpack.c.h.b16 %v139
    %v185 = vunpack.c.l.b16 %v140
    %v186 = vunpack.c.h.b16 %v140
    %v187 = vunpack.c.l.b16 %v141
    %v188 = vunpack.c.h.b16 %v141
    %v189 = vunpack.c.l.b16 %v142
    %v190 = vunpack.c.h.b16 %v142
    %v191 = vunpack.c.l.b16 %v143
    %v192 = vunpack.c.h.b16 %v143
    %v193 = vunpack.c.l.b16 %v144
    %v194 = vunpack.c.h.b16 %v144
    %v195 = vunpack.c.l.b16 %v145
    %v196 = vunpack.c.h.b16 %v145
    %v197 = vunpack.c.l.b16 %v146
    %v198 = vunpack.c.h.b16 %v146
    %v199 = vunpack.c.l.b16 %v147
    %v200 = vunpack.c.h.b16 %v147
    %v201 = vunpack.c.l.b16 %v148
    %v202 = vunpack.c.h.b16 %v148
    %v203 = vunpack.c.l.b16 %v149
    %v204 = vunpack.c.h.b16 %v149
    %v205 = vunpack.c.l.b16 %v150
    %v206 = vunpack.c.h.b16 %v150
    %v207 = vunpack.c.l.b16 %v151
    %v208 = vunpack.c.h.b16 %v151
    %v209 = vunpack.c.l.b16 %v152
    %v210 = vunpack.c.h.b16 %v152
    %v211 = vunpack.c.l.b16 %v153
    %v212 = vunpack.c.h.b16 %v153
    %v213 = vunpack.c.l.b16 %v154
    %v214 = vunpack.c.h.b16 %v154
    %v215 = vpack.c.b16 %v185, %v183
    %v216 = vpack.c.b16 %v186, %v184
    %v217 = vpack.c.b16 %v189, %v187
    %v218 = vpack.c.b16 %v190, %v188
    %v219 = vpack.c.b16 %v193, %v191
    %v220 = vpack.c.b16 %v194, %v192
    %v221 = vpack.c.b16 %v197, %v195
    %v222 = vpack.c.b16 %v198, %v196
    %v223 = vpack.c.b16 %v201, %v199
    %v224 = vpack.c.b16 %v202, %v200
    %v225 = vpack.c.b16 %v205, %v203
    %v226 = vpack.c.b16 %v206, %v204
    %v227 = vpack.c.b16 %v209, %v207
    %v228 = vpack.c.b16 %v210, %v208
    %v229 = vpack.c.b16 %v213, %v211
    %v230 = vpack.c.b16 %v214, %v212
    %247 = vmatprep.subr.bf16.mxu0 %v230
    %248 = vmatpush1.bf16.msra.mxu0 %v229
    %249 = vmatprep.subr.bf16.mxu0 %v228
    %250 = vmatpush1.bf16.msra.mxu0 %v227
    %251 = vmatprep.subr.bf16.mxu0 %v226
    %252 = vmatpush1.bf16.msra.mxu0 %v225
    %253 = vmatprep.subr.bf16.mxu0 %v224
    %254 = vmatpush1.bf16.msra.mxu0 %v223
    %255 = vmatprep.subr.bf16.mxu0 %v222
    %256 = vmatpush1.bf16.msra.mxu0 %v221
    %257 = vmatprep.subr.bf16.mxu0 %v220
    %258 = vmatpush1.bf16.msra.mxu0 %v219
    %259 = vmatprep.subr.bf16.mxu0 %v218
    %260 = vmatpush1.bf16.msra.mxu0 %v217
    %261 = vmatprep.subr.bf16.mxu0 %v216
    %262 = vmatpush1.bf16.msra.mxu0 %v215
    %263 = vmatprep.subr.bf16.mxu0 0
    %264 = vmatpush2.bf16.msra.mxu0 0
    %265 = vmatprep.subr.bf16.mxu0 0
    %266 = vmatpush2.bf16.msra.mxu0 0
    %267 = vmatprep.subr.bf16.mxu0 0
    %268 = vmatpush2.bf16.msra.mxu0 0
    %269 = vmatprep.subr.bf16.mxu0 0
    %270 = vmatpush2.bf16.msra.mxu0 0
    %271 = vmatprep.subr.bf16.mxu0 0
    %272 = vmatpush2.bf16.msra.mxu0 0
    %273 = vmatprep.subr.bf16.mxu0 0
    %274 = vmatpush2.bf16.msra.mxu0 0
    %275 = vmatprep.subr.bf16.mxu0 0
    %276 = vmatpush2.bf16.msra.mxu0 0
    %277 = vmatprep.subr.bf16.mxu0 0
    %278 = vmatpush2.bf16.msra.mxu0 0
    %279 = vmatprep.mubr.bf16.mxu0 0
    %280 = vmatmul.mubr.bf16.gmra.mxu0 %v138
    %v281 = vpop.f32.mrf.mxu0
    %v282 = vadd.f32 %v160, %v281
    %v283 = vpop.f32.mrf.mxu0
    %v284 = vadd.f32 %v164, %v283
    %v285 = vpop.f32.mrf.mxu0
    %v286 = vadd.f32 %v160, %v285
    %v287 = vpop.f32.mrf.mxu0
    %v288 = vadd.f32 %v164, %v287
    %289 = vdwg.mxu0
    %v290 = vsub.f32 0.0, %v282
    %v291 = vsub.f32 0.0, %v284
    %v292 = vsub.f32 0.0, %v286
    %v293 = vsub.f32 0.0, %v288
    %v294 = vmul.f32 %v290, 1.442695
    %v295 = vpow.pop %v294
    %v296 = vmul.f32 %v291, 1.442695
    %v297 = vpow.pop %v296
    %v298 = vmul.f32 %v292, 1.442695
    %v299 = vpow.pop %v298
    %v300 = vmul.f32 %v293, 1.442695
    %v301 = vpow.pop %v300
    %v302 = vadd.f32 %v295, 1.0
    %v303 = vadd.f32 %v297, 1.0
    %v304 = vadd.f32 %v299, 1.0
    %v305 = vadd.f32 %v301, 1.0
    %v306 = vrcp.pop %v302
    %v307 = vrcp.pop %v303
    %v308 = vrcp.pop %v304
    %v309 = vrcp.pop %v305
    %310 = vst [vmem:[%s5] sm:$0xff] %v306
    %311 = vst [vmem:[%s5 + $0x8] sm:$0xff] %v307
    %312 = vst [vmem:[%s5 + $0x10] sm:$0xff] %v308
    %313 = vst [vmem:[%s5 + $0x18] sm:$0xff] %v309
    // Predicated region
    $region30: #{decoder_forward.1} parent=1 // pred_check
      _
    $region31: #{decoder_forward.1} parent=1 // pred_check_branch
      %315 = sbr.rel (0) target = $region33
    $region32: #{decoder_forward.1} parent=1 // pred_region
      _
    $region33: #{decoder_forward.1} parent=1 // pred_fallthru
      _
    // Predicated region
    $region34: #{decoder_forward.1} parent=1 // pred_check
      _
    $region35: #{decoder_forward.1} parent=1 // pred_check_branch
      %317 = sbr.rel (0) target = $region37
    $region36: #{decoder_forward.1} parent=1 // pred_region
      _
    $region37: #{decoder_forward.1} parent=1 // pred_fallthru
      _
    %318 = vsyncpa [#allocation3], 1
    %319 = vsyncpa [#allocation5], 1

</llo_original>
